<compile_context>
chip_gen: v5e
topology: v5e:2x2
jax: 0.10.0
libtpu: 0.0.40
codegen_flags: <defaults>
</compile_context>

<pallas_src>
import jax
import jax.numpy as jnp
from jax import lax
from jax.experimental import pallas as pl
from jax.experimental.pallas import tpu as pltpu


def _new_loss_kernel(target_ref, src_ref, wb_row_ref, wb_col_ref,
                     loss_ref, wmat_ref, z_acc, sx_ref):
    i = pl.program_id(0)
    n = pl.num_programs(0)

    t = target_ref[...]          # (p, p)   resident across the whole grid
    s = src_ref[...]             # (tm, p)  row tile of source (Y)
    wb_r = wb_row_ref[...]       # (tm, p)  row tile of W_beta (for w = sum(1))
    wb_c = wb_col_ref[...]       # (p, tm)  column slab of W_beta (z accumulation)

    @pl.when(i == 0)
    def _init():
        sx_ref[...] = jnp.sum(t * t)[None, None]       # sum(target**2), computed once
        z_acc[...] = jnp.zeros_like(z_acc)

    sx = sx_ref[...]                                   # (1, 1)

    # per-row scale:  w[i]^2 / (sx * w[i]^2 + 1)
    w = jnp.sum(wb_r, axis=1, keepdims=True)           # (tm, 1)
    w2 = w * w
    denom = sx * w2 + 1.0                              # (tm, 1)
    r = pl.reciprocal(denom, approx=True)              # EUP vrcp (otherwise idle)
    r = r * (2.0 - denom * r)                          # one Newton step -> ~f32 exact
    scale = w2 * r

    # source_tile @ target^T without materializing the transpose.
    yx = lax.dot_general(s, t, dimension_numbers=(((1,), (1,)), ((), ())),
                         preferred_element_type=jnp.float32)        # (tm, p)
    wmat = scale * yx
    wmat_ref[...] = wmat

    # primary row tile and its contribution to z = W_beta @ primary.
    primary = jnp.dot(wmat, t, preferred_element_type=jnp.float32) - s   # (tm, p)
    z_acc[...] += jnp.dot(wb_c, primary, preferred_element_type=jnp.float32)

    @pl.when(i == n - 1)
    def _finalize():
        z = z_acc[...]
        loss_ref[...] = jnp.sqrt(jnp.sum(z * z))[None, None]


def _pick_row_tile(p):
    # Row tile is also the lane dim of the W_beta column slab, so it must be a
    # multiple of 128 or span the whole array.
    for tm in (512, 256, 128):
        if p % tm == 0:
            return tm
    return p


def new_loss_forward(target, source, w_beta):
    """Returns (loss scalar f32, W_matrix (p, p) f32)."""
    p = target.shape[0]
    assert target.shape == (p, p) and source.shape == (p, p) and w_beta.shape == (p, p)
    target = target.astype(jnp.float32)
    source = source.astype(jnp.float32)
    w_beta = w_beta.astype(jnp.float32)

    tm = _pick_row_tile(p)
    grid = (p // tm,)

    # Footprint: resident target + z accumulator + (double-buffered) row/col tiles.
    fp_bytes = 4 * (3 * p * p + 14 * tm * p)
    vmem_limit = int(min(max(2 * fp_bytes + (1 << 20), 32 * 1024 * 1024),
                         64 * 1024 * 1024))

    loss2d, wmat = pl.pallas_call(
        _new_loss_kernel,
        out_shape=(
            jax.ShapeDtypeStruct((1, 1), jnp.float32),
            jax.ShapeDtypeStruct((p, p), jnp.float32),
        ),
        grid_spec=pltpu.PrefetchScalarGridSpec(
            num_scalar_prefetch=0,
            grid=grid,
            in_specs=[
                pl.BlockSpec((p, p), lambda i: (0, 0)),    # target (resident)
                pl.BlockSpec((tm, p), lambda i: (i, 0)),   # source row tile
                pl.BlockSpec((tm, p), lambda i: (i, 0)),   # W_beta row tile
                pl.BlockSpec((p, tm), lambda i: (0, i)),   # W_beta column slab
            ],
            out_specs=(
                pl.BlockSpec((1, 1), lambda i: (0, 0)),    # loss (written on last step)
                pl.BlockSpec((tm, p), lambda i: (i, 0)),   # W_matrix row tile
            ),
            scratch_shapes=[
                pltpu.VMEM((p, p), jnp.float32),           # z = W_beta @ primary accumulator
                pltpu.VMEM((1, 1), jnp.float32),           # sx = sum(target**2)
            ],
        ),
        compiler_params=pltpu.CompilerParams(
            dimension_semantics=("arbitrary",),            # carried accumulator -> sequential
            vmem_limit_bytes=vmem_limit,
        ),
        cost_estimate=pl.CostEstimate(
            flops=6 * p * p * p,
            transcendentals=p + 1,
            bytes_accessed=5 * 4 * p * p,
        ),
    )(target, source, w_beta, w_beta)
    return loss2d[0, 0], wmat


def _reference(target, source, w_beta):
    # pure-JAX reference mirroring the PyTorch loops (full f32 precision)
    hp = jax.lax.Precision.HIGHEST
    sx = jnp.sum(target * target)
    w = jnp.sum(w_beta, axis=1)
    scale = (w * w) / (sx * w * w + 1.0)
    wmat = scale[:, None] * jnp.dot(source, target.T, precision=hp)
    primary = jnp.dot(wmat, target, precision=hp) - source
    z = jnp.dot(w_beta, primary, precision=hp)
    return jnp.sqrt(jnp.sum(z * z)), wmat


if __name__ == "__main__":
    key = jax.random.PRNGKey(0)
    # p=16: single-tile path (as implied by the module's small square X/Y);
    # p=256: exercises the multi-tile accumulation path (grid of 2 row tiles).
    for p in (16, 256):
        k1, k2, k3 = jax.random.split(jax.random.fold_in(key, p), 3)
        target = jax.random.normal(k1, (p, p), dtype=jnp.float32)   # X
        source = jax.random.normal(k2, (p, p), dtype=jnp.float32)   # Y
        w_beta = jax.random.normal(k3, (p, p), dtype=jnp.float32)

        loss, wmat = jax.block_until_ready(new_loss_forward(target, source, w_beta))
        ref_loss, ref_wmat = _reference(target, source, w_beta)

        assert jnp.allclose(wmat, ref_wmat, rtol=1e-5, atol=1e-5), f"W_matrix mismatch at p={p}"
        assert jnp.allclose(loss, ref_loss, rtol=1e-5, atol=1e-5), f"loss mismatch at p={p}"

    print("KERNEL_OK")
</pallas_src>

<mosaic_0001>
module attributes {stable_mosaic.version = 11 : i64} {
  func.func @_new_loss_kernel(%arg0: i32, %arg1: memref<16x16xf32, #tpu.memory_space<vmem>>, %arg2: memref<16x16xf32, #tpu.memory_space<vmem>>, %arg3: memref<16x16xf32, #tpu.memory_space<vmem>>, %arg4: memref<16x16xf32, #tpu.memory_space<vmem>>, %arg5: memref<1x1xf32, #tpu.memory_space<vmem>>, %arg6: memref<16x16xf32, #tpu.memory_space<vmem>>, %arg7: memref<16x16xf32, #tpu.memory_space<vmem>>, %arg8: memref<1x1xf32, #tpu.memory_space<vmem>>) attributes {dimension_semantics = [#tpu.dimension_semantics<arbitrary>], iteration_bounds = array<i64: 1>, scalar_prefetch = 0 : i64, scratch_operands = 2 : i64, tpu.core_type = #tpu.core_type<tc>, window_params = [{pipeline_mode = #tpu.pipeline_mode<synchronous>, transform_indices = @transform_0, window_bounds = array<i64: 16, 16>}, {transform_indices = @transform_1, window_bounds = array<i64: 16, 16>}, {transform_indices = @transform_2, window_bounds = array<i64: 16, 16>}, {transform_indices = @transform_3, window_bounds = array<i64: 16, 16>}, {pipeline_mode = #tpu.pipeline_mode<synchronous>, transform_indices = @transform_4, window_bounds = array<i64: 1, 1>}, {transform_indices = @transform_5, window_bounds = array<i64: 16, 16>}]} {
    %c0 = arith.constant 0 : index
    %c0_0 = arith.constant 0 : index
    %0 = vector.load %arg1[%c0, %c0_0] : memref<16x16xf32, #tpu.memory_space<vmem>>, vector<16x16xf32>
    %c0_1 = arith.constant 0 : index
    %c0_2 = arith.constant 0 : index
    %1 = vector.load %arg2[%c0_1, %c0_2] : memref<16x16xf32, #tpu.memory_space<vmem>>, vector<16x16xf32>
    %c0_3 = arith.constant 0 : index
    %c0_4 = arith.constant 0 : index
    %2 = vector.load %arg3[%c0_3, %c0_4] : memref<16x16xf32, #tpu.memory_space<vmem>>, vector<16x16xf32>
    %c0_5 = arith.constant 0 : index
    %c0_6 = arith.constant 0 : index
    %3 = vector.load %arg4[%c0_5, %c0_6] : memref<16x16xf32, #tpu.memory_space<vmem>>, vector<16x16xf32>
    %c0_i32 = arith.constant 0 : i32
    %4 = arith.cmpi eq, %arg0, %c0_i32 : i32
    %5 = arith.extui %4 : i1 to i32
    %c0_i32_7 = arith.constant 0 : i32
    %6 = arith.cmpi ne, %5, %c0_i32_7 : i32
    scf.if %6 {
      %34 = arith.mulf %0, %0 : vector<16x16xf32>
      %35 = vector.shape_cast %34 : vector<16x16xf32> to vector<1x16x16xf32>
      %cst_23 = arith.constant dense<0.000000e+00> : vector<1xf32>
      %36 = vector.multi_reduction <add>, %35, %cst_23 [1, 2] : vector<1x16x16xf32> to vector<1xf32>
      %37 = vector.shape_cast %36 : vector<1xf32> to vector<1x1x1xf32>
      %38 = vector.extract %37[0, 0, 0] : f32 from vector<1x1x1xf32>
      %39 = vector.broadcast %38 : f32 to vector<1x1xf32>
      %c0_24 = arith.constant 0 : index
      %c0_25 = arith.constant 0 : index
      %40 = vector.load %arg8[%c0_24, %c0_25] : memref<1x1xf32, #tpu.memory_space<vmem>>, vector<1x1xf32>
      tpu.vector_store %arg8[%c0_24, %c0_25], %39 {strides = array<i32>} : memref<1x1xf32, #tpu.memory_space<vmem>>, vector<1x1xf32>,
      %cst_26 = arith.constant 0.000000e+00 : f32
      %41 = vector.broadcast %cst_26 : f32 to vector<16x16xf32>
      %c0_27 = arith.constant 0 : index
      %c0_28 = arith.constant 0 : index
      %42 = vector.load %arg7[%c0_27, %c0_28] : memref<16x16xf32, #tpu.memory_space<vmem>>, vector<16x16xf32>
      tpu.vector_store %arg7[%c0_27, %c0_28], %41 {strides = array<i32>} : memref<16x16xf32, #tpu.memory_space<vmem>>, vector<16x16xf32>,
    } else {
    }
    %c0_8 = arith.constant 0 : index
    %c0_9 = arith.constant 0 : index
    %7 = vector.load %arg8[%c0_8, %c0_9] : memref<1x1xf32, #tpu.memory_space<vmem>>, vector<1x1xf32>
    %cst = arith.constant dense<0.000000e+00> : vector<16xf32>
    %8 = vector.multi_reduction <add>, %2, %cst [1] : vector<16x16xf32> to vector<16xf32>
    %9 = vector.shape_cast %8 : vector<16xf32> to vector<16x1xf32>
    %10 = arith.mulf %9, %9 : vector<16x1xf32>
    %11 = vector.broadcast %7 : vector<1x1xf32> to vector<16x1xf32>
    %12 = arith.mulf %11, %10 : vector<16x1xf32>
    %cst_10 = arith.constant 1.000000e+00 : f32
    %13 = vector.broadcast %cst_10 : f32 to vector<16x1xf32>
    %14 = arith.addf %12, %13 : vector<16x1xf32>
    %15 = tpu.reciprocal %14 {approx = true} : vector<16x1xf32> -> vector<16x1xf32>
    %16 = arith.mulf %14, %15 : vector<16x1xf32>
    %cst_11 = arith.constant 2.000000e+00 : f32
    %17 = vector.broadcast %cst_11 : f32 to vector<16x1xf32>
    %18 = arith.subf %17, %16 : vector<16x1xf32>
    %19 = arith.mulf %15, %18 : vector<16x1xf32>
    %20 = arith.mulf %10, %19 : vector<16x1xf32>
    %cst_12 = arith.constant dense<0.000000e+00> : vector<16x16xf32>
    %21 = tpu.matmul %1, %0, %cst_12 {dimension_numbers = #tpu.dot_dimension_numbers<[1], [1], [0], [0], [0, 0, 1, 0], [], []>} : vector<16x16xf32>, vector<16x16xf32>, vector<16x16xf32> -> vector<16x16xf32>
    %22 = vector.broadcast %20 : vector<16x1xf32> to vector<16x16xf32>
    %23 = arith.mulf %22, %21 : vector<16x16xf32>
    %c0_13 = arith.constant 0 : index
    %c0_14 = arith.constant 0 : index
    %24 = vector.load %arg6[%c0_13, %c0_14] : memref<16x16xf32, #tpu.memory_space<vmem>>, vector<16x16xf32>
    tpu.vector_store %arg6[%c0_13, %c0_14], %23 {strides = array<i32>} : memref<16x16xf32, #tpu.memory_space<vmem>>, vector<16x16xf32>,
    %cst_15 = arith.constant dense<0.000000e+00> : vector<16x16xf32>
    %25 = tpu.matmul %23, %0, %cst_15 {dimension_numbers = #tpu.dot_dimension_numbers<[1], [0], [0], [1], [0, 0, 1, 1], [], []>} : vector<16x16xf32>, vector<16x16xf32>, vector<16x16xf32> -> vector<16x16xf32>
    %26 = arith.subf %25, %1 : vector<16x16xf32>
    %c0_16 = arith.constant 0 : index
    %c0_17 = arith.constant 0 : index
    %27 = vector.load %arg7[%c0_16, %c0_17] : memref<16x16xf32, #tpu.memory_space<vmem>>, vector<16x16xf32>
    %cst_18 = arith.constant dense<0.000000e+00> : vector<16x16xf32>
    %28 = tpu.matmul %3, %26, %cst_18 {dimension_numbers = #tpu.dot_dimension_numbers<[1], [0], [0], [1], [0, 0, 1, 1], [], []>} : vector<16x16xf32>, vector<16x16xf32>, vector<16x16xf32> -> vector<16x16xf32>
    %29 = arith.addf %27, %28 : vector<16x16xf32>
    %c0_19 = arith.constant 0 : index
    %c0_20 = arith.constant 0 : index
    %30 = vector.load %arg7[%c0_19, %c0_20] : memref<16x16xf32, #tpu.memory_space<vmem>>, vector<16x16xf32>
    tpu.vector_store %arg7[%c0_19, %c0_20], %29 {strides = array<i32>} : memref<16x16xf32, #tpu.memory_space<vmem>>, vector<16x16xf32>,
    %c0_i32_21 = arith.constant 0 : i32
    %31 = arith.cmpi eq, %arg0, %c0_i32_21 : i32
    %32 = arith.extui %31 : i1 to i32
    %c0_i32_22 = arith.constant 0 : i32
    %33 = arith.cmpi ne, %32, %c0_i32_22 : i32
    scf.if %33 {
      %c0_23 = arith.constant 0 : index
      %c0_24 = arith.constant 0 : index
      %34 = vector.load %arg7[%c0_23, %c0_24] : memref<16x16xf32, #tpu.memory_space<vmem>>, vector<16x16xf32>
      %35 = arith.mulf %34, %34 : vector<16x16xf32>
      %36 = vector.shape_cast %35 : vector<16x16xf32> to vector<1x16x16xf32>
      %cst_25 = arith.constant dense<0.000000e+00> : vector<1xf32>
      %37 = vector.multi_reduction <add>, %36, %cst_25 [1, 2] : vector<1x16x16xf32> to vector<1xf32>
      %38 = vector.shape_cast %37 : vector<1xf32> to vector<1x1x1xf32>
      %39 = vector.extract %38[0, 0, 0] : f32 from vector<1x1x1xf32>
      %40 = math.sqrt %39 : f32
      %41 = vector.broadcast %40 : f32 to vector<1x1xf32>
      %c0_26 = arith.constant 0 : index
      %c0_27 = arith.constant 0 : index
      %42 = vector.load %arg5[%c0_26, %c0_27] : memref<1x1xf32, #tpu.memory_space<vmem>>, vector<1x1xf32>
      tpu.vector_store %arg5[%c0_26, %c0_27], %41 {strides = array<i32>} : memref<1x1xf32, #tpu.memory_space<vmem>>, vector<1x1xf32>,
    } else {
    }
    return
  }
  func.func @transform_0(%arg0: i32) -> (i32, i32) {
    %c0_i32 = arith.constant 0 : i32
    %c0_i32_0 = arith.constant 0 : i32
    %c0_i32_1 = arith.constant 0 : i32
    return %c0_i32, %c0_i32_0 : i32, i32
  }
  func.func @transform_1(%arg0: i32) -> (i32, i32) {
    %c0_i32 = arith.constant 0 : i32
    %c0_i32_0 = arith.constant 0 : i32
    return %arg0, %c0_i32 : i32, i32
  }
  func.func @transform_2(%arg0: i32) -> (i32, i32) {
    %c0_i32 = arith.constant 0 : i32
    %c0_i32_0 = arith.constant 0 : i32
    return %arg0, %c0_i32 : i32, i32
  }
  func.func @transform_3(%arg0: i32) -> (i32, i32) {
    %c0_i32 = arith.constant 0 : i32
    %c0_i32_0 = arith.constant 0 : i32
    return %c0_i32, %arg0 : i32, i32
  }
  func.func @transform_4(%arg0: i32) -> (i32, i32) {
    %c0_i32 = arith.constant 0 : i32
    %c0_i32_0 = arith.constant 0 : i32
    %c0_i32_1 = arith.constant 0 : i32
    return %c0_i32, %c0_i32_0 : i32, i32
  }
  func.func @transform_5(%arg0: i32) -> (i32, i32) {
    %c0_i32 = arith.constant 0 : i32
    %c0_i32_0 = arith.constant 0 : i32
    return %arg0, %c0_i32 : i32, i32
  }
}

</mosaic_0001>

<llo_original>
// kernel: tpu_custom_call.1
$region0: #{tpu_custom_call.1}
  #allocation0 [shape = 'u32[]', space=smem, size = 0x4, offset = 0x4, fixed_abs, tag = 'smem constant byte address 0x4 - core index']
  #allocation1 [shape = 'u32[72,128]{1,0:T(1,128)}', space=vmem, size = 0x9000, scoped, tag = 'internal scratch']
  #allocation2 [shape = 'f32[16,16]{1,0:T(8,128)}', space=vmem, size = 0x2000, scoped, tag = 'scratch operand']
  #allocation3 [shape = 'f32[1,1]{1,0:T(1,128)}', space=vmem, size = 0x200, scoped, tag = 'scratch operand']
  %s0 = inlined_call_operand.hbm [shape: f32[16,16], index: 0, kind: input, shape index: {}]
  %s1 = inlined_call_operand.hbm [shape: f32[16,16], index: 1, kind: input, shape index: {}]
  %s2 = inlined_call_operand.hbm [shape: f32[16,16], index: 2, kind: input, shape index: {}]
  %s3 = inlined_call_operand.hbm [shape: f32[16,16], index: 3, kind: input, shape index: {}]
  %s4 = inlined_call_operand.hbm [shape: f32[1,1], index: 4, kind: output, shape index: {0}]
  %s5 = inlined_call_operand.hbm [shape: f32[16,16], index: 5, kind: output, shape index: {1}]
  %6 = xla_tuple %s4, %s5
  %s7 = sld [smem:[#allocation0]]
  $region58: #{tpu_custom_call.1} parent=0
    _
  %s9 = ssub.s32 1, %s7
  %s10 = scalar_select 0, %s9, %s7
  $region1: #{tpu_custom_call.1} parent=0
    #allocation4 [shape = 'u8[8192]{0}', space=vmem, size = 0x2000, scoped, tag = 'input window, operand 0, single buffered']
    #allocation5 [shape = 's32[1]{0}', space=sflag, size = 0x4, scoped, tag = 'scoped memory for tpu_custom_call.1']
    #allocation6 [shape = 's32[1]{0}', space=sflag, size = 0x4, scoped, tag = 'scoped memory for tpu_custom_call.1']
    #allocation7 [shape = 'u8[8192]{0}', space=vmem, size = 0x2000, scoped, tag = 'input window, operand 1, single buffered']
    #allocation8 [shape = 's32[1]{0}', space=sflag, size = 0x4, scoped, tag = 'scoped memory for tpu_custom_call.1']
    #allocation9 [shape = 'u8[8192]{0}', space=vmem, size = 0x2000, scoped, tag = 'input window, operand 2, single buffered']
    #allocation10 [shape = 'u8[8192]{0}', space=vmem, size = 0x2000, scoped, tag = 'input window, operand 3, single buffered']
    #allocation11 [shape = 's32[1]{0}', space=sflag, size = 0x4, scoped, tag = 'scoped memory for tpu_custom_call.1']
    #allocation12 [shape = 'u8[512]{0}', space=vmem, size = 0x400, scoped, tag = 'output window, operand 0, single buffered']
    #allocation13 [shape = 'u8[8192]{0}', space=vmem, size = 0x2000, scoped, tag = 'output window, operand 1, single buffered']
    #allocation14 [shape = 's32[1]{0}', space=sflag, size = 0x4, scoped, tag = 'scoped memory for tpu_custom_call.1']
    %11 = vsyncpa [#allocation5], 0
    %12 = vsyncpa [#allocation8], 0
    %13 = vsyncpa [#allocation11], 0
    %14 = vsyncpa [#allocation6], 0
    %15 = vsyncpa [#allocation14], 0
    // Predicated region
    $region2: #{tpu_custom_call.1} parent=1 // pred_check
      _
    $region3: #{tpu_custom_call.1} parent=1 // pred_check_branch
      %17 = sbr.rel (0) target = $region5
    $region4: #{tpu_custom_call.1} parent=1 // pred_region
      %19 = vsyncadd [#allocation5], 0
      %s20 = sshll.u32 %s0, 4
      %s21 = int_to_ptr.hbm [resolvable:$true] %s20
      %s22 = sshll.u32 [#allocation4], 4
      %s23 = int_to_ptr.vmem [resolvable:$true] %s22
      %28 = dma.hbm_to_vmem [thread:$0]  %s21, 256, %s23, [#allocation5], 128, 128, 8
    $region5: #{tpu_custom_call.1} parent=1 // pred_fallthru
      _
    // Predicated region
    $region6: #{tpu_custom_call.1} parent=1 // pred_check
      _
    $region7: #{tpu_custom_call.1} parent=1 // pred_check_branch
      %30 = sbr.rel (0) target = $region9
    $region8: #{tpu_custom_call.1} parent=1 // pred_region
      %32 = vsyncadd [#allocation8], 0
      %s33 = sshll.u32 %s1, 4
      %s34 = int_to_ptr.hbm [resolvable:$true] %s33
      %s35 = sshll.u32 [#allocation7], 4
      %s36 = int_to_ptr.vmem [resolvable:$true] %s35
      %41 = dma.hbm_to_vmem [thread:$0]  %s34, 256, %s36, [#allocation8], 128, 128, 8
    $region9: #{tpu_custom_call.1} parent=1 // pred_fallthru
      _
    // Predicated region
    $region10: #{tpu_custom_call.1} parent=1 // pred_check
      _
    $region11: #{tpu_custom_call.1} parent=1 // pred_check_branch
      %43 = sbr.rel (0) target = $region13
    $region12: #{tpu_custom_call.1} parent=1 // pred_region
      %45 = vsyncadd [#allocation8], 0
      %s46 = sshll.u32 %s2, 4
      %s47 = int_to_ptr.hbm [resolvable:$true] %s46
      %s48 = sshll.u32 [#allocation9], 4
      %s49 = int_to_ptr.vmem [resolvable:$true] %s48
      %54 = dma.hbm_to_vmem [thread:$0]  %s47, 256, %s49, [#allocation8], 128, 128, 8
    $region13: #{tpu_custom_call.1} parent=1 // pred_fallthru
      _
    // Predicated region
    $region14: #{tpu_custom_call.1} parent=1 // pred_check
      _
    $region15: #{tpu_custom_call.1} parent=1 // pred_check_branch
      %56 = sbr.rel (0) target = $region17
    $region16: #{tpu_custom_call.1} parent=1 // pred_region
      %58 = vsyncadd [#allocation11], 0
      %s59 = sshll.u32 %s3, 4
      %s60 = int_to_ptr.hbm [resolvable:$true] %s59
      %s61 = sshll.u32 [#allocation10], 4
      %s62 = int_to_ptr.vmem [resolvable:$true] %s61
      %67 = dma.hbm_to_vmem [thread:$0]  %s60, 256, %s62, [#allocation11], 128, 128, 8
    $region17: #{tpu_custom_call.1} parent=1 // pred_fallthru
      _
    // Predicated region
    $region18: #{tpu_custom_call.1} parent=1 // pred_check
      _
    $region19: #{tpu_custom_call.1} parent=1 // pred_check_branch
      %69 = sbr.rel (0) target = $region21
    $region20: #{tpu_custom_call.1} parent=1 // pred_region
      %71 = dma.done [#allocation5], 256
    $region21: #{tpu_custom_call.1} parent=1 // pred_fallthru
      _
    // Predicated region
    $region22: #{tpu_custom_call.1} parent=1 // pred_check
      _
    $region23: #{tpu_custom_call.1} parent=1 // pred_check_branch
      %73 = sbr.rel (0) target = $region25
    $region24: #{tpu_custom_call.1} parent=1 // pred_region
      %75 = dma.done [#allocation8], 256
    $region25: #{tpu_custom_call.1} parent=1 // pred_fallthru
      _
    // Predicated region
    $region26: #{tpu_custom_call.1} parent=1 // pred_check
      _
    $region27: #{tpu_custom_call.1} parent=1 // pred_check_branch
      %77 = sbr.rel (0) target = $region29
    $region28: #{tpu_custom_call.1} parent=1 // pred_region
      %79 = dma.done [#allocation8], 256
    $region29: #{tpu_custom_call.1} parent=1 // pred_fallthru
      _
    // Predicated region
    $region30: #{tpu_custom_call.1} parent=1 // pred_check
      _
    $region31: #{tpu_custom_call.1} parent=1 // pred_check_branch
      %81 = sbr.rel (0) target = $region33
    $region32: #{tpu_custom_call.1} parent=1 // pred_region
      %83 = dma.done [#allocation11], 256
    $region33: #{tpu_custom_call.1} parent=1 // pred_fallthru
      _
    %v84 = vld [vmem:[#allocation4] sm:$0xff]
    %v85 = vld [vmem:[#allocation4 + $0x8] sm:$0xff]
    %v86 = vld [vmem:[#allocation7] sm:$0xff]
    %v87 = vld [vmem:[#allocation7 + $0x8] sm:$0xff]
    %v88 = vld [vmem:[#allocation9] sm:$0xff]
    %v89 = vld [vmem:[#allocation9 + $0x8] sm:$0xff]
    %v90 = vld [vmem:[#allocation10] sm:$0xff]
    %v91 = vld [vmem:[#allocation10 + $0x8] sm:$0xff]
    %p92 = scmp.eq.s32.totalorder 0, 0
    // Predicated region
    $region34: #{tpu_custom_call.1} parent=1 // pred_check
      %p93 = pneg %p92
    $region35: #{tpu_custom_call.1} parent=1 // pred_check_branch
      %95 = sbr.rel (%p93) target = $region37
    $region36: #{tpu_custom_call.1} parent=1 // pred_region
      %v96 = vmul.f32 %v84, %v84
      %v97 = vmul.f32 %v85, %v85
      %vm98 = vcmask 130048
      %v99 = vsel %vm98, %v96, 0.0
      %v100 = vsel %vm98, %v97, 0.0
      %v101 = vadd.f32 %v99, %v100
      %102 = vadd.xlane.f32.xlu0 %v101
      %v103 = vpop.xlane.xlu0 %102
      %v104 = vrot.slane %v103, 4
      %v105 = vadd.f32 %v103, %v104
      %v106 = vrot.slane %v105, 2
      %v107 = vadd.f32 %v105, %v106
      %v108 = vrot.slane %v107, 1
      %v109 = vadd.f32 %v107, %v108
      %s110 = vtos %v109
      %v111 = vstv %s110
      %vm112 = vcmask 0
      %113 = vst.msk [vmem:[#allocation3] sm:$0x1] %vm112, %v111
      %114 = vst.msk [vmem:[#allocation2] sm:$0xff] %vm98, 0.0
      %115 = vst.msk [vmem:[#allocation2 + $0x8] sm:$0xff] %vm98, 0.0
    $region37: #{tpu_custom_call.1} parent=1 // pred_fallthru
      _
    %v116 = vld [vmem:[#allocation3] sm:$0x1]
    %vm117 = vcmask 130048
    %v118 = vsel %vm117, %v88, 0.0
    %119 = vadd.xlane.f32.xlu0 %v118
    %v120 = vpop.xlane.xlu0 %119
    %v121 = vsel %vm117, %v89, 0.0
    %122 = vadd.xlane.f32.xlu0 %v121
    %v123 = vpop.xlane.xlu0 %122
    %v124 = vmul.f32 %v120, %v120
    %v125 = vmul.f32 %v123, %v123
    %v127 = vperm.slane %v116, 0
    %v129 = vmul.f32 %v127, %v124
    %v130 = vmul.f32 %v127, %v125
    %v131 = vadd.f32 %v129, 1.0
    %v132 = vadd.f32 %v130, 1.0
    %v133 = vrcp.pop %v131
    %v134 = vrcp.pop %v132
    %v135 = vmul.f32 %v131, %v133
    %v136 = vmul.f32 %v132, %v134
    %v137 = vsub.f32 2.0, %v135
    %v138 = vsub.f32 2.0, %v136
    %v139 = vmul.f32 %v133, %v137
    %v140 = vmul.f32 %v134, %v138
    %v141 = vmul.f32 %v124, %v139
    %v142 = vmul.f32 %v125, %v140
    %v144 = vsel %vm117, %v86, 0
    %v147 = vsel %vm117, %v87, 0
    %v150 = vsel %vm117, %v84, 0
    %v153 = vsel %vm117, %v85, 0
    %155 = vmatpush.xpose.msra.mxu0 0.0
    %156 = vmatpush.xpose.msra.mxu0 0.0
    %157 = vmatpush.xpose.msra.mxu0 0.0
    %158 = vmatpush.xpose.msra.mxu0 0.0
    %159 = vmatpush.xpose.msra.mxu0 0.0
    %160 = vmatpush.xpose.msra.mxu0 0.0
    %161 = vmatpush.xpose.msra.mxu0 0.0
    %162 = vmatpush.xpose.msra.mxu0 0.0
    %163 = vmatpush.xpose.msra.mxu0 0.0
    %164 = vmatpush.xpose.msra.mxu0 0.0
    %165 = vmatpush.xpose.msra.mxu0 0.0
    %166 = vmatpush.xpose.msra.mxu0 0.0
    %167 = vmatpush.xpose.msra.mxu0 0.0
    %168 = vmatpush.xpose.msra.mxu0 0.0
    %169 = vmatpush.xpose.msra.mxu0 %v153
    %170 = vmatpush.xpose.msra.mxu0 %v150
    %171 = vmatmul.f32.gmra.mxu0 %v144
    %v172 = vpop.f32.mrf.mxu0
    %v173 = vadd.f32 0.0, %v172
    %174 = vmatmul.f32.gmra.mxu0 %v147
    %v175 = vpop.f32.mrf.mxu0
    %v176 = vadd.f32 0.0, %v175
    %177 = vdwg.mxu0
    %179 = vset.pattern.permute.xlu0 0
    %180 = vperm.xlu0 %179, %v141
    %v181 = vpop.permute.xlu0 %180
    %184 = vset.pattern.permute.xlu0 0
    %185 = vperm.xlu0 %184, %v142
    %v186 = vpop.permute.xlu0 %185
    %v188 = vmul.f32 %v181, %v173
    %v189 = vmul.f32 %v186, %v176
    %190 = vst.msk [vmem:[#allocation13] sm:$0xff] %vm117, %v188
    %191 = vst.msk [vmem:[#allocation13 + $0x8] sm:$0xff] %vm117, %v189
    %v193 = vsel %vm117, %v188, 0
    %v196 = vsel %vm117, %v189, 0
    %198 = vmatpush.msra.mxu0 0.0
    %199 = vmatpush.msra.mxu0 0.0
    %200 = vmatpush.msra.mxu0 0.0
    %201 = vmatpush.msra.mxu0 0.0
    %202 = vmatpush.msra.mxu0 0.0
    %203 = vmatpush.msra.mxu0 0.0
    %204 = vmatpush.msra.mxu0 0.0
    %205 = vmatpush.msra.mxu0 0.0
    %206 = vmatpush.msra.mxu0 0.0
    %207 = vmatpush.msra.mxu0 0.0
    %208 = vmatpush.msra.mxu0 0.0
    %209 = vmatpush.msra.mxu0 0.0
    %210 = vmatpush.msra.mxu0 0.0
    %211 = vmatpush.msra.mxu0 0.0
    %212 = vmatpush.msra.mxu0 %v85
    %213 = vmatpush.msra.mxu0 %v84
    %214 = vmatmul.f32.gmra.mxu0 %v193
    %v215 = vpop.f32.mrf.mxu0
    %v216 = vadd.f32 0.0, %v215
    %217 = vmatmul.f32.gmra.mxu0 %v196
    %v218 = vpop.f32.mrf.mxu0
    %v219 = vadd.f32 0.0, %v218
    %220 = vdwg.mxu0
    %v221 = vsub.f32 %v216, %v86
    %v222 = vsub.f32 %v219, %v87
    %v223 = vld [vmem:[#allocation2] sm:$0xff]
    %v224 = vld [vmem:[#allocation2 + $0x8] sm:$0xff]
    %v226 = vsel %vm117, %v90, 0
    %v229 = vsel %vm117, %v91, 0
    %231 = vmatpush.msra.mxu0 0.0
    %232 = vmatpush.msra.mxu0 0.0
    %233 = vmatpush.msra.mxu0 0.0
    %234 = vmatpush.msra.mxu0 0.0
    %235 = vmatpush.msra.mxu0 0.0
    %236 = vmatpush.msra.mxu0 0.0
    %237 = vmatpush.msra.mxu0 0.0
    %238 = vmatpush.msra.mxu0 0.0
    %239 = vmatpush.msra.mxu0 0.0
    %240 = vmatpush.msra.mxu0 0.0
    %241 = vmatpush.msra.mxu0 0.0
    %242 = vmatpush.msra.mxu0 0.0
    %243 = vmatpush.msra.mxu0 0.0
    %244 = vmatpush.msra.mxu0 0.0
    %245 = vmatpush.msra.mxu0 %v222
    %246 = vmatpush.msra.mxu0 %v221
    %247 = vmatmul.f32.gmra.mxu0 %v226
    %v248 = vpop.f32.mrf.mxu0
    %v249 = vadd.f32 0.0, %v248
    %250 = vmatmul.f32.gmra.mxu0 %v229
    %v251 = vpop.f32.mrf.mxu0
    %v252 = vadd.f32 0.0, %v251
    %253 = vdwg.mxu0
    %v254 = vadd.f32 %v223, %v249
    %v255 = vadd.f32 %v224, %v252
    %256 = vst.msk [vmem:[#allocation2] sm:$0xff] %vm117, %v254
    %257 = vst.msk [vmem:[#allocation2 + $0x8] sm:$0xff] %vm117, %v255
    // Predicated region
    $region38: #{tpu_custom_call.1} parent=1 // pred_check
      %p258 = pneg %p92
    $region39: #{tpu_custom_call.1} parent=1 // pred_check_branch
      %260 = sbr.rel (%p258) target = $region41
    $region40: #{tpu_custom_call.1} parent=1 // pred_region
      %v261 = vld [vmem:[#allocation2] sm:$0xff]
      %v262 = vld [vmem:[#allocation2 + $0x8] sm:$0xff]
      %v263 = vmul.f32 %v261, %v261
      %v264 = vmul.f32 %v262, %v262
      %v265 = vsel %vm117, %v263, 0.0
      %v266 = vsel %vm117, %v264, 0.0
      %v267 = vadd.f32 %v265, %v266
      %268 = vadd.xlane.f32.xlu0 %v267
      %v269 = vpop.xlane.xlu0 %268
      %v270 = vrot.slane %v269, 4
      %v271 = vadd.f32 %v269, %v270
      %v272 = vrot.slane %v271, 2
      %v273 = vadd.f32 %v271, %v272
      %v274 = vrot.slane %v273, 1
      %v275 = vadd.f32 %v273, %v274
      %s276 = vtos %v275
      %v277 = vstv %s276
      %v278 = vrsqrt.pop %v277
      %v279 = vmul.f32 %v278, %v277
      %v280 = vmul.f32 %v279, %v278
      %v281 = vmul.f32 0.5, %v280
      %v282 = vsub.f32 1.5, %v281
      %v283 = vmul.f32 %v278, %v282
      %v284 = vmul.f32 %v277, %v283
      %vm285 = vcmp.eq.f32.partialorder %v277, inf
      %v286 = vsel %vm285, %v277, %v284
      %vm287 = vcmp.eq.f32.partialorder %v277, 0.0
      %v288 = vand.u32 %v277, 2147483648
      %v289 = vsel %vm287, %v288, %v286
      %s290 = vtos %v289
      %v291 = vstv %s290
      %vm292 = vcmask 0
      %293 = vst.msk [vmem:[#allocation12] sm:$0x1] %vm292, %v291
    $region41: #{tpu_custom_call.1} parent=1 // pred_fallthru
      _
    // Predicated region
    $region42: #{tpu_custom_call.1} parent=1 // pred_check
      _
    $region43: #{tpu_custom_call.1} parent=1 // pred_check_branch
      %295 = sbr.rel (0) target = $region45
    $region44: #{tpu_custom_call.1} parent=1 // pred_region
      %297 = vsyncadd [#allocation6], 0
      %s299 = sshll.u32 [#allocation12], 4
      %s300 = int_to_ptr.vmem [resolvable:$true] %s299
      %s301 = sshll.u32 %s4, 4
      %s302 = int_to_ptr.hbm [resolvable:$true] %s301
      %304 = dma.vmem_to_hbm [thread:$0]  %s300, 16, %s302, [#allocation6]
    $region45: #{tpu_custom_call.1} parent=1 // pred_fallthru
      _
    // Predicated region
    $region46: #{tpu_custom_call.1} parent=1 // pred_check
      _
    $region47: #{tpu_custom_call.1} parent=1 // pred_check_branch
      %306 = sbr.rel (0) target = $region49
    $region48: #{tpu_custom_call.1} parent=1 // pred_region
      %308 = vsyncadd [#allocation14], 0
      %s309 = sshll.u32 [#allocation13], 4
      %s310 = int_to_ptr.vmem [resolvable:$true] %s309
      %s311 = sshll.u32 %s5, 4
      %s312 = int_to_ptr.hbm [resolvable:$true] %s311
      %317 = dma.vmem_to_hbm [thread:$0]  %s310, 256, %s312, [#allocation14], 128, 128, 8
    $region49: #{tpu_custom_call.1} parent=1 // pred_fallthru
      _
    // Predicated region
    $region50: #{tpu_custom_call.1} parent=1 // pred_check
      _
    $region51: #{tpu_custom_call.1} parent=1 // pred_check_branch
      %319 = sbr.rel (0) target = $region53
    $region52: #{tpu_custom_call.1} parent=1 // pred_region
      %321 = dma.done [#allocation6], 16
    $region53: #{tpu_custom_call.1} parent=1 // pred_fallthru
      _
    // Predicated region
    $region54: #{tpu_custom_call.1} parent=1 // pred_check
      _
    $region55: #{tpu_custom_call.1} parent=1 // pred_check_branch
      %323 = sbr.rel (0) target = $region57
    $region56: #{tpu_custom_call.1} parent=1 // pred_region
      %325 = dma.done [#allocation14], 256
    $region57: #{tpu_custom_call.1} parent=1 // pred_fallthru
      _
    %326 = vsyncpa [#allocation5], 1
    %327 = vsyncpa [#allocation8], 1
    %328 = vsyncpa [#allocation11], 1
    %329 = vsyncpa [#allocation6], 1
    %330 = vsyncpa [#allocation14], 1

</llo_original>
